<compile_context>
chip_gen: v7x
topology: tpu7x:2x2x1
jax: 0.10.0
libtpu: 0.0.40
codegen_flags: <defaults>
</compile_context>

<pallas_src>
import functools
import math

import jax
import jax.numpy as jnp
from jax import lax
from jax.experimental import pallas as pl
from jax.experimental.pallas import tpu as pltpu


# ----------------------------------------------------------------------------
# Tiling helper
# ----------------------------------------------------------------------------

def _pick_tile(dim, preferred, step=128):
    """Largest multiple of `step` <= preferred that divides `dim`; else min(preferred, dim)."""
    best = None
    t = step
    while t <= min(preferred, dim):
        if dim % t == 0:
            best = t
        t += step
    return best if best is not None else min(preferred, dim)


# ----------------------------------------------------------------------------
# Linear (bias-fused) kernel
# ----------------------------------------------------------------------------

def _linear_kernel(x_ref, w_ref, b_ref, o_ref):
    # x_ref: (tm, K), w_ref: (K, tn), b_ref: (1, tn), o_ref: (tm, tn)
    acc = jnp.dot(x_ref[...], w_ref[...], preferred_element_type=jnp.float32)
    o_ref[...] = (acc + b_ref[...].astype(jnp.float32)).astype(o_ref.dtype)


def pallas_linear(x2d, w, b, tm=256, tn=256):
    """y = x2d @ w + b, tiled over rows and output columns (lane-dense tiles)."""
    M, K = x2d.shape
    Kw, N = w.shape
    assert K == Kw
    tm = _pick_tile(M, tm)
    tn = _pick_tile(N, tn)
    grid = (pl.cdiv(M, tm), pl.cdiv(N, tn))
    b2d = b.reshape(1, N)

    itemsize = jnp.dtype(x2d.dtype).itemsize
    cost = pl.CostEstimate(
        flops=2 * M * K * N,
        transcendentals=0,
        bytes_accessed=(M * K + K * N + N + M * N) * itemsize,
    )
    return pl.pallas_call(
        _linear_kernel,
        out_shape=jax.ShapeDtypeStruct((M, N), x2d.dtype),
        grid_spec=pltpu.PrefetchScalarGridSpec(
            num_scalar_prefetch=0,
            grid=grid,
            in_specs=[
                pl.BlockSpec((tm, K), lambda i, j: (i, 0)),
                pl.BlockSpec((K, tn), lambda i, j: (0, j)),   # weight column tile resident over i
                pl.BlockSpec((1, tn), lambda i, j: (0, j)),
            ],
            out_specs=pl.BlockSpec((tm, tn), lambda i, j: (i, j)),
        ),
        compiler_params=pltpu.CompilerParams(
            dimension_semantics=("parallel", "parallel")),
        cost_estimate=cost,
    )(x2d, w, b2d)


# ----------------------------------------------------------------------------
# Flash-style causal multi-head attention kernel
# ----------------------------------------------------------------------------

def _flash_attn_kernel(q_ref, k_ref, v_ref, o_ref, acc_ref, m_ref, l_ref,
                       *, n_head, blk):
    # q_ref/k_ref/v_ref/o_ref: (1, blk, C) tiles (heads packed along C).
    # acc_ref: (blk, C) f32, m_ref/l_ref: (n_head, blk, 1) f32 scratch (persist over ki).
    qi = pl.program_id(1)
    ki = pl.program_id(2)
    nk = pl.num_programs(2)

    C = q_ref.shape[-1]
    dh = C // n_head
    scale = 1.0 / math.sqrt(dh)

    @pl.when(ki == 0)
    def _init():
        m_ref[...] = jnp.full_like(m_ref, -jnp.inf)
        l_ref[...] = jnp.zeros_like(l_ref)
        acc_ref[...] = jnp.zeros_like(acc_ref)

    def _accumulate(mask):
        # One KV block of online softmax, statically unrolled over heads.
        for h in range(n_head):
            lo = h * dh
            q_h = q_ref[0, :, lo:lo + dh] * scale          # fold 1/sqrt(dh) into q (O(blk*dh))
            k_h = k_ref[0, :, lo:lo + dh]
            v_h = v_ref[0, :, lo:lo + dh]
            s = lax.dot_general(q_h, k_h, (((1,), (1,)), ((), ())),
                                preferred_element_type=jnp.float32)  # (blk, blk) f32
            if mask is not None:
                s = jnp.where(mask, s, -jnp.inf)
            m_prev = m_ref[h]                               # (blk, 1)
            l_prev = l_ref[h]
            m_new = jnp.maximum(m_prev, jnp.max(s, axis=-1, keepdims=True))
            alpha = jnp.exp(m_prev - m_new)
            p = jnp.exp(s - m_new)
            l_ref[h] = alpha * l_prev + jnp.sum(p, axis=-1, keepdims=True)
            m_ref[h] = m_new
            acc_ref[:, lo:lo + dh] = alpha * acc_ref[:, lo:lo + dh] + jnp.dot(
                p.astype(v_h.dtype), v_h, preferred_element_type=jnp.float32)

    # Strictly-below-diagonal KV blocks: fully unmasked, no iota/mask work at all.
    @pl.when(ki < qi)
    def _full_block():
        _accumulate(None)

    # Diagonal block: causal mask (local row >= col, since tq == tkv == blk).
    @pl.when(ki == qi)
    def _diag_block():
        row = lax.broadcasted_iota(jnp.int32, (blk, blk), 0)
        col = lax.broadcasted_iota(jnp.int32, (blk, blk), 1)
        _accumulate(row >= col)

    # KV blocks with ki > qi: skipped entirely; their index_map is pinned to the
    # diagonal block, so no additional DMA traffic is issued either.

    @pl.when(ki == nk - 1)
    def _finalize():
        for h in range(n_head):
            lo = h * dh
            inv = pl.reciprocal(l_ref[h], approx=True)      # EUP, nearly free
            acc_ref[:, lo:lo + dh] = acc_ref[:, lo:lo + dh] * inv
        o_ref[0] = acc_ref[...].astype(o_ref.dtype)          # single lane-dense (blk, C) store


def pallas_flash_attention(qkv, n_head, blk_preferred=256):
    """qkv: (B, T, 3C) packed [q | k | v] -> (B, T, C) causal multi-head attention."""
    B, T, C3 = qkv.shape
    C = C3 // 3
    assert 3 * C == C3
    assert C % n_head == 0
    assert C % 128 == 0, "n_embd must be a multiple of 128 for lane-dense tiles"
    blk = _pick_tile(T, blk_preferred)
    assert T % blk == 0, "sequence length must tile into blocks (multiple of 128, or T<=256)"
    nq = T // blk
    dh = C // n_head

    # q / k / v are column-blocks 0 / 1 / 2 of the packed QKV tensor.
    q_spec = pl.BlockSpec((1, blk, C), lambda b, qi, ki: (b, qi, 0))
    k_spec = pl.BlockSpec((1, blk, C), lambda b, qi, ki: (b, jnp.minimum(ki, qi), 1))
    v_spec = pl.BlockSpec((1, blk, C), lambda b, qi, ki: (b, jnp.minimum(ki, qi), 2))
    o_spec = pl.BlockSpec((1, blk, C), lambda b, qi, ki: (b, qi, 0))

    itemsize = jnp.dtype(qkv.dtype).itemsize
    cost = pl.CostEstimate(
        flops=4 * B * n_head * T * T * dh,        # QK^T + PV (upper bound, pre-causal-skip)
        transcendentals=B * n_head * T * T,       # exp
        bytes_accessed=(B * T * 3 * C + B * T * C) * itemsize,
    )

    kernel = functools.partial(_flash_attn_kernel, n_head=n_head, blk=blk)
    return pl.pallas_call(
        kernel,
        out_shape=jax.ShapeDtypeStruct((B, T, C), qkv.dtype),
        grid_spec=pltpu.PrefetchScalarGridSpec(
            num_scalar_prefetch=0,
            grid=(B, nq, nq),
            in_specs=[q_spec, k_spec, v_spec],
            out_specs=o_spec,
            scratch_shapes=[
                pltpu.VMEM((blk, C), jnp.float32),           # acc (all heads, lane-dense)
                pltpu.VMEM((n_head, blk, 1), jnp.float32),   # running max m
                pltpu.VMEM((n_head, blk, 1), jnp.float32),   # running sum l
            ],
        ),
        compiler_params=pltpu.CompilerParams(
            dimension_semantics=("parallel", "parallel", "arbitrary")),
        cost_estimate=cost,
    )(qkv, qkv, qkv)


# ----------------------------------------------------------------------------
# Full module forward
# ----------------------------------------------------------------------------

def causal_self_attention(x, params, n_head):
    """Forward pass equivalent to the PyTorch CausalSelfAttention module."""
    B, T, C = x.shape
    x2d = x.reshape(B * T, C)
    qkv = pallas_linear(x2d, params["w_attn"], params["b_attn"])   # (B*T, 3C)
    qkv = qkv.reshape(B, T, 3 * C)                                 # free reshape, no split/transpose
    y = pallas_flash_attention(qkv, n_head)                        # (B, T, C)
    y = pallas_linear(y.reshape(B * T, C), params["w_proj"], params["b_proj"])
    return y.reshape(B, T, C)


# ----------------------------------------------------------------------------
# Pure-JAX reference (for correctness check)
# ----------------------------------------------------------------------------

def reference(x, params, n_head):
    B, T, C = x.shape
    hd = C // n_head
    qkv = x @ params["w_attn"] + params["b_attn"]
    q, k, v = jnp.split(qkv, 3, axis=-1)

    def to_heads(t):
        return t.reshape(B, T, n_head, hd).transpose(0, 2, 1, 3)

    q, k, v = to_heads(q), to_heads(k), to_heads(v)
    s = jnp.einsum("bhqd,bhkd->bhqk", q, k) / math.sqrt(hd)
    mask = jnp.tril(jnp.ones((T, T), dtype=bool))
    s = jnp.where(mask, s, -jnp.inf)
    p = jax.nn.softmax(s, axis=-1)
    y = jnp.einsum("bhqk,bhkd->bhqd", p, v)
    y = y.transpose(0, 2, 1, 3).reshape(B, T, C)
    return y @ params["w_proj"] + params["b_proj"]


# ----------------------------------------------------------------------------
# Main
# ----------------------------------------------------------------------------

if __name__ == "__main__":
    # Small config consistent with the module: n_embd % n_head == 0.
    # (f32 here so the reference check is tight; the kernels are dtype-agnostic
    #  and take the bf16 MXU path when fed bf16 activations/weights.)
    B, T, n_embd, n_head = 2, 128, 128, 4

    key = jax.random.PRNGKey(0)
    kx, k1, k2, k3, k4 = jax.random.split(key, 5)

    x = jax.random.normal(kx, (B, T, n_embd), dtype=jnp.float32)

    # Deterministic synthetic parameters (stored as [in, out], i.e. W_torch.T).
    params = {
        "w_attn": 0.02 * jax.random.normal(k1, (n_embd, 3 * n_embd), jnp.float32),
        "b_attn": 0.02 * jax.random.normal(k2, (3 * n_embd,), jnp.float32),
        "w_proj": 0.02 * jax.random.normal(k3, (n_embd, n_embd), jnp.float32),
        "b_proj": 0.02 * jax.random.normal(k4, (n_embd,), jnp.float32),
    }

    y = causal_self_attention(x, params, n_head)
    y = jax.block_until_ready(y)

    y_ref = reference(x, params, n_head)
    assert y.shape == (B, T, n_embd)
    assert jnp.allclose(y, y_ref, atol=2e-3, rtol=2e-3), "mismatch vs reference"

    print("KERNEL_OK")
</pallas_src>

<mosaic_0001>
module attributes {stable_mosaic.version = 11 : i64} {
  func.func @_linear_kernel(%arg0: i32, %arg1: i32, %arg2: memref<256x128xf32, #tpu.memory_space<vmem>>, %arg3: memref<128x128xf32, #tpu.memory_space<vmem>>, %arg4: memref<1x128xf32, #tpu.memory_space<vmem>>, %arg5: memref<256x128xf32, #tpu.memory_space<vmem>>) attributes {dimension_semantics = [#tpu.dimension_semantics<parallel>, #tpu.dimension_semantics<parallel>], iteration_bounds = array<i64: 1, 3>, scalar_prefetch = 0 : i64, scratch_operands = 0 : i64, tpu.core_type = #tpu.core_type<tc>, window_params = [{transform_indices = @transform_0, window_bounds = array<i64: 256, 128>}, {transform_indices = @transform_1, window_bounds = array<i64: 128, 128>}, {transform_indices = @transform_2, window_bounds = array<i64: 1, 128>}, {transform_indices = @transform_3, window_bounds = array<i64: 256, 128>}]} {
    %c0 = arith.constant 0 : index
    %c0_0 = arith.constant 0 : index
    %0 = vector.load %arg2[%c0, %c0_0] : memref<256x128xf32, #tpu.memory_space<vmem>>, vector<256x128xf32>
    %c0_1 = arith.constant 0 : index
    %c0_2 = arith.constant 0 : index
    %1 = vector.load %arg3[%c0_1, %c0_2] : memref<128x128xf32, #tpu.memory_space<vmem>>, vector<128x128xf32>
    %cst = arith.constant dense<0.000000e+00> : vector<256x128xf32>
    %2 = tpu.matmul %0, %1, %cst {dimension_numbers = #tpu.dot_dimension_numbers<[1], [0], [0], [1], [0, 0, 1, 1], [], []>} : vector<256x128xf32>, vector<128x128xf32>, vector<256x128xf32> -> vector<256x128xf32>
    %c0_3 = arith.constant 0 : index
    %c0_4 = arith.constant 0 : index
    %3 = vector.load %arg4[%c0_3, %c0_4] : memref<1x128xf32, #tpu.memory_space<vmem>>, vector<1x128xf32>
    %4 = vector.broadcast %3 : vector<1x128xf32> to vector<256x128xf32>
    %5 = arith.addf %2, %4 : vector<256x128xf32>
    %c0_5 = arith.constant 0 : index
    %c0_6 = arith.constant 0 : index
    %6 = vector.load %arg5[%c0_5, %c0_6] : memref<256x128xf32, #tpu.memory_space<vmem>>, vector<256x128xf32>
    tpu.vector_store %arg5[%c0_5, %c0_6], %5 {strides = array<i32>} : memref<256x128xf32, #tpu.memory_space<vmem>>, vector<256x128xf32>,
    return
  }
  func.func @transform_0(%arg0: i32, %arg1: i32) -> (i32, i32) {
    %c0_i32 = arith.constant 0 : i32
    %c0_i32_0 = arith.constant 0 : i32
    return %arg0, %c0_i32 : i32, i32
  }
  func.func @transform_1(%arg0: i32, %arg1: i32) -> (i32, i32) {
    %c0_i32 = arith.constant 0 : i32
    %c0_i32_0 = arith.constant 0 : i32
    return %c0_i32, %arg1 : i32, i32
  }
  func.func @transform_2(%arg0: i32, %arg1: i32) -> (i32, i32) {
    %c0_i32 = arith.constant 0 : i32
    %c0_i32_0 = arith.constant 0 : i32
    return %c0_i32, %arg1 : i32, i32
  }
  func.func @transform_3(%arg0: i32, %arg1: i32) -> (i32, i32) {
    %c0_i32 = arith.constant 0 : i32
    return %arg0, %arg1 : i32, i32
  }
}

</mosaic_0001>

<llo_original>
// kernel: tpu_custom_call.1
$region0: #{tpu_custom_call.1}
  #allocation0 [shape = 'u32[]', space=smem, size = 0x4, offset = 0x4, fixed_abs, tag = 'smem constant byte address 0x4 - core index']
  #allocation1 [shape = 'u32[144,128]{1,0:T(1,128)}', space=vmem, size = 0x12000, scoped, tag = 'internal scratch']
  %s0 = inlined_call_operand.hbm [shape: f32[256,128], index: 0, kind: input, shape index: {}]
  %s1 = inlined_call_operand.hbm [shape: f32[128,384], index: 1, kind: input, shape index: {}]
  %s2 = inlined_call_operand.vmem [shape: f32[1,384], index: 2, kind: input, shape index: {}]
  %s3 = inlined_call_operand.hbm [shape: f32[256,384], index: 3, kind: output, shape index: {}]
  %s4 = sld [smem:[#allocation0]]
  $region53: #{tpu_custom_call.1} parent=0
    _
  %s6 = ssub.s32 1, %s4
  %s7 = scalar_select 0, %s6, %s4
  $region1: #{tpu_custom_call.1} parent=0
    #allocation2 [shape = 'u8[131072]{0}', space=vmem, size = 0x20000, scoped, tag = 'input window, operand 0, single buffered']
    #allocation3 [shape = 's32[2]{0}', space=sflag, size = 0x8, scoped, tag = 'scoped memory for tpu_custom_call.1']
    #allocation4 [shape = 's32[2]{0}', space=sflag, size = 0x8, scoped, tag = 'scoped memory for tpu_custom_call.1']
    #allocation5 [shape = 'u8[131072]{0}', space=vmem, size = 0x20000, scoped, tag = 'input window, operand 1']
    #allocation6 [shape = 's32[2]{0}', space=sflag, size = 0x8, scoped, tag = 'scoped memory for tpu_custom_call.1']
    #allocation7 [shape = 'u8[262144]{0}', space=vmem, size = 0x40000, scoped, tag = 'output window, operand 0']
    %8 = vsyncpa [#allocation3], 0
    %9 = vsyncpa [#allocation6], 0
    %s10 = scalar_lea.sflag [#allocation6], 1
    %11 = vsyncpa %s10, 0
    %12 = vsyncpa [#allocation4], 0
    %s13 = scalar_lea.sflag [#allocation4], 1
    %14 = vsyncpa %s13, 0
    loop: start=0, step=1, limit=5
    $region2: #{tpu_custom_call.1} parent=1 // loop_pre_header
      _
    $region3: #{tpu_custom_call.1} parent=1 // loop_header
      %s16 = sphi 0, %s20
      %p17 = scmp.ge.s32.totalorder %s16, 5
      %s23 = sphi 0, %s35
      %s24 = sphi 0, %s31
      %s25 = sphi 0, %s23
      %s26 = sphi 0, %s24
      %s27 = sphi 0, %s25
      %s28 = sphi 0, %s26
      %s38 = sphi 0, %s40
      %s41 = sphi 0, %s38
      %s42 = sphi 0, %s41
      %s58 = sphi 0, %s42
      %s64 = sphi 0, %s66
      %s67 = sphi 0, %s64
      %s68 = sphi 0, %s67
      %s84 = sphi 0, %s68
      %s90 = sphi 0, %s92
      %s93 = sphi 0, %s90
      %s94 = sphi 0, %s93
      %s110 = sphi 0, %s94
      %s118 = sphi 0, %s120
      %s121 = sphi 0, %s118
      %s122 = sphi 0, %s121
      %s138 = sphi 0, %s122
    $region4: #{tpu_custom_call.1} parent=1 // loop_header_branch
      %19 = sbr.rel (%p17) target = $region8
    $region5: #{tpu_custom_call.1} parent=1 // loop_body
      %s21 = ssub.s32 %s16, 1
      %s22 = ssub.s32 %s16, 2
      %s29 = sadd.s32 1, %s24
      %p30 = scmp.ge.s32.totalorder %s29, 3
      %s31 = scalar_select %p30, 0, %s29
      %s32 = sadd.s32 1, %s23
      %s33 = scalar_select %p30, %s32, %s23
      %p34 = scmp.ge.s32.totalorder %s33, 1
      %s35 = scalar_select %p34, 0, %s33
      %s36 = ssub.s32 %s23, %s35
      %p37 = scmp.eq.s32.totalorder %s36, 0
      %s39 = sadd.s32 %s38, 1
      %s40 = scalar_select %p37, %s38, %s39
      %p43 = pneg %p37
      %p44 = scmp.eq.s32.totalorder %s16, 2
      %p45 = por %p43, %p44
      %p46 = scmp.ne.s32.totalorder %s38, %s41
      %p47 = scmp.eq.s32.totalorder %s16, 0
      %p48 = por %p46, %p47
      %p49 = scmp.ne.s32.totalorder %s38, %s41
      %p50 = scmp.eq.s32.totalorder %s21, 2
      %p51 = por %p49, %p50
      %p52 = scmp.ne.s32.totalorder %s41, %s42
      %p53 = scmp.eq.s32.totalorder %s21, 0
      %p54 = por %p52, %p53
      %p55 = scmp.ne.s32.totalorder %s41, %s42
      %p56 = scmp.eq.s32.totalorder %s22, 2
      %p57 = por %p55, %p56
      %p59 = scmp.ne.s32.totalorder %s42, %s58
      %p60 = scmp.eq.s32.totalorder %s22, 0
      %p61 = por %p59, %p60
      %s62 = ssub.s32 %s24, %s31
      %p63 = scmp.eq.s32.totalorder %s62, 0
      %s65 = sadd.s32 %s64, 1
      %s66 = scalar_select %p63, %s64, %s65
      %p69 = pneg %p63
      %p70 = scmp.eq.s32.totalorder %s16, 2
      %p71 = por %p69, %p70
      %p72 = scmp.ne.s32.totalorder %s64, %s67
      %p73 = scmp.eq.s32.totalorder %s16, 0
      %p74 = por %p72, %p73
      %p75 = scmp.ne.s32.totalorder %s64, %s67
      %p76 = scmp.eq.s32.totalorder %s21, 2
      %p77 = por %p75, %p76
      %p78 = scmp.ne.s32.totalorder %s67, %s68
      %p79 = scmp.eq.s32.totalorder %s21, 0
      %p80 = por %p78, %p79
      %p81 = scmp.ne.s32.totalorder %s67, %s68
      %p82 = scmp.eq.s32.totalorder %s22, 2
      %p83 = por %p81, %p82
      %p85 = scmp.ne.s32.totalorder %s68, %s84
      %p86 = scmp.eq.s32.totalorder %s22, 0
      %p87 = por %p85, %p86
      %s88 = ssub.s32 %s24, %s31
      %p89 = scmp.eq.s32.totalorder %s88, 0
      %s91 = sadd.s32 %s90, 1
      %s92 = scalar_select %p89, %s90, %s91
      %p95 = pneg %p89
      %p96 = scmp.eq.s32.totalorder %s16, 2
      %p97 = por %p95, %p96
      %p98 = scmp.ne.s32.totalorder %s90, %s93
      %p99 = scmp.eq.s32.totalorder %s16, 0
      %p100 = por %p98, %p99
      %p101 = scmp.ne.s32.totalorder %s90, %s93
      %p102 = scmp.eq.s32.totalorder %s21, 2
      %p103 = por %p101, %p102
      %p104 = scmp.ne.s32.totalorder %s93, %s94
      %p105 = scmp.eq.s32.totalorder %s21, 0
      %p106 = por %p104, %p105
      %p107 = scmp.ne.s32.totalorder %s93, %s94
      %p108 = scmp.eq.s32.totalorder %s22, 2
      %p109 = por %p107, %p108
      %p111 = scmp.ne.s32.totalorder %s94, %s110
      %p112 = scmp.eq.s32.totalorder %s22, 0
      %p113 = por %p111, %p112
      %s114 = ssub.s32 %s23, %s35
      %s115 = ssub.s32 %s24, %s31
      %s116 = sor.u32 %s114, %s115
      %p117 = scmp.eq.s32.totalorder %s116, 0
      %s119 = sadd.s32 %s118, 1
      %s120 = scalar_select %p117, %s118, %s119
      %p123 = pneg %p117
      %p124 = scmp.eq.s32.totalorder %s16, 2
      %p125 = por %p123, %p124
      %p126 = scmp.ne.s32.totalorder %s118, %s121
      %p127 = scmp.eq.s32.totalorder %s16, 0
      %p128 = por %p126, %p127
      %p129 = scmp.ne.s32.totalorder %s118, %s121
      %p130 = scmp.eq.s32.totalorder %s21, 2
      %p131 = por %p129, %p130
      %p132 = scmp.ne.s32.totalorder %s121, %s122
      %p133 = scmp.eq.s32.totalorder %s21, 0
      %p134 = por %p132, %p133
      %p135 = scmp.ne.s32.totalorder %s121, %s122
      %p136 = scmp.eq.s32.totalorder %s22, 2
      %p137 = por %p135, %p136
      %p139 = scmp.ne.s32.totalorder %s122, %s138
      %p140 = scmp.eq.s32.totalorder %s22, 0
      %p141 = por %p139, %p140
      %p142 = scmp.le.s32.totalorder 1, %s16
      %p143 = scmp.lt.s32.totalorder %s16, 4
      %p144 = pnand %p142, %p143
      %p145 = pneg %p144
      // Predicated region
      $region9: #{tpu_custom_call.1} parent=5 // pred_check
        _
      $region10: #{tpu_custom_call.1} parent=5 // pred_check_branch
        %147 = sbr.rel (%p144) target = $region12
      $region11: #{tpu_custom_call.1} parent=5 // pred_region
        %s148 = ssub.s32 %s16, 1
        // Predicated region
        $region13: #{tpu_custom_call.1} parent=11 // pred_check
          %p149 = pneg %p54
        $region14: #{tpu_custom_call.1} parent=11 // pred_check_branch
          %151 = sbr.rel (%p149) target = $region16
        $region15: #{tpu_custom_call.1} parent=11 // pred_region
          %s152 = smul.u32 32, %s25
          %s154 = ssub.s32 4096, 4096
          %155 = vsyncadd [#allocation3], %s154
          %s156 = smul.addr %s152, 128
          %s157 = scalar_lea.hbm %s0, %s156
          %s158 = sshll.u32 [#allocation2], 4
          %s159 = int_to_ptr.vmem [resolvable:$true] %s158
          %164 = dma.hbm_to_vmem [thread:$0]  %s157, 4096, %s159, [#allocation3], 128, 128, 8
        $region16: #{tpu_custom_call.1} parent=11 // pred_fallthru
          _
      $region12: #{tpu_custom_call.1} parent=5 // pred_fallthru
        _
      %p165 = scmp.lt.s32.totalorder %s16, 3
      // Predicated region
      $region17: #{tpu_custom_call.1} parent=5 // pred_check
        %p166 = pneg %p165
      $region18: #{tpu_custom_call.1} parent=5 // pred_check_branch
        %168 = sbr.rel (%p166) target = $region20
      $region19: #{tpu_custom_call.1} parent=5 // pred_region
        // Predicated region
        $region21: #{tpu_custom_call.1} parent=19 // pred_check
          %p169 = pneg %p74
        $region22: #{tpu_custom_call.1} parent=19 // pred_check_branch
          %171 = sbr.rel (%p169) target = $region24
        $region23: #{tpu_custom_call.1} parent=19 // pred_region
          %s172 = sand.u32 %s64, 1
          %s173 = scalar_lea.sflag [#allocation6], %s172
          %s174 = sand.u32 %s64, 1
          %s175 = smul.addr %s174, 128
          %s176 = scalar_lea.vmem [#allocation5], %s175
          %s178 = ssub.s32 2048, 2048
          %179 = vsyncadd %s173, %s178
          %s180 = smul.addr %s24, 128
          %s181 = scalar_lea.hbm %s1, %s180
          %s182 = sshll.u32 %s176, 4
          %s183 = int_to_ptr.vmem [resolvable:$true] %s182
          %188 = dma.hbm_to_vmem [thread:$0]  %s181, 2048, %s183, %s173, 384, 128, 8
        $region24: #{tpu_custom_call.1} parent=19 // pred_fallthru
          _
        // Predicated region
        $region25: #{tpu_custom_call.1} parent=19 // pred_check
          %p189 = pneg %p100
        $region26: #{tpu_custom_call.1} parent=19 // pred_check_branch
          %191 = sbr.rel (%p189) target = $region28
        $region27: #{tpu_custom_call.1} parent=19 // pred_region
          %p192 = scmp.lt.s32.totalorder %s24, 2
          %s193 = scalar_select %p192, %s24, 2
          %s194 = scalar_lea.vmem %s2, %s193
        $region28: #{tpu_custom_call.1} parent=19 // pred_fallthru
          _
      $region20: #{tpu_custom_call.1} parent=5 // pred_fallthru
        _
      %p195 = scmp.le.s32.totalorder 1, %s16
      %p196 = scmp.lt.s32.totalorder %s16, 4
      %p197 = pnand %p195, %p196
      %p198 = pneg %p197
      // Predicated region
      $region29: #{tpu_custom_call.1} parent=5 // pred_check
        _
      $region30: #{tpu_custom_call.1} parent=5 // pred_check_branch
        %200 = sbr.rel (%p197) target = $region32
      $region31: #{tpu_custom_call.1} parent=5 // pred_region
        %s201 = ssub.s32 %s16, 1
        // Predicated region
        $region33: #{tpu_custom_call.1} parent=31 // pred_check
          %p202 = pneg %p54
        $region34: #{tpu_custom_call.1} parent=31 // pred_check_branch
          %204 = sbr.rel (%p202) target = $region36
        $region35: #{tpu_custom_call.1} parent=31 // pred_region
          %205 = dma.done [#allocation3], 4096
        $region36: #{tpu_custom_call.1} parent=31 // pred_fallthru
          _
        %s206 = sand.u32 %s67, 1
        %s207 = scalar_lea.sflag [#allocation6], %s206
        %s208 = sand.u32 %s67, 1
        %s209 = smul.addr %s208, 128
        %s210 = scalar_lea.vmem [#allocation5], %s209
        // Predicated region
        $region37: #{tpu_custom_call.1} parent=31 // pred_check
          %p211 = pneg %p80
        $region38: #{tpu_custom_call.1} parent=31 // pred_check_branch
          %213 = sbr.rel (%p211) target = $region40
        $region39: #{tpu_custom_call.1} parent=31 // pred_region
          %214 = dma.done %s207, 2048
        $region40: #{tpu_custom_call.1} parent=31 // pred_fallthru
          _
        %p215 = pneg %p54
        %p216 = pneg %p51
        %s217 = sand.u32 %s67, 1
        %s218 = scalar_lea.sflag [#allocation6], %s217
        %s219 = sand.u32 %s67, 1
        %s220 = smul.addr %s219, 128
        %s221 = scalar_lea.vmem [#allocation5], %s220
        %p222 = pneg %p80
        %p223 = pneg %p77
        %p224 = scmp.lt.s32.totalorder %s26, 2
        %s225 = scalar_select %p224, %s26, 2
        %s226 = scalar_lea.vmem %s2, %s225
        %p227 = pneg %p106
        %p228 = pneg %p103
        %p229 = pneg %p134
        %p230 = pneg %p131
        %s231 = sand.u32 %s121, 1
        %s232 = scalar_lea.sflag [#allocation4], %s231
        %s233 = sand.u32 %s121, 1
        %s234 = smul.addr %s233, 256
        %s235 = scalar_lea.vmem [#allocation7], %s234
        %s236 = smul.u32 32, %s25
        %p237 = scmp.lt.s32.totalorder %s26, 2
        %s238 = scalar_select %p237, %s26, 2
        %s239 = scalar_lea.vmem %s2, %s238
        %s240 = smul.u32 32, %s25
        %v241 = vld [vmem:[#allocation2] sm:$0xff]
        %v242 = vld [vmem:[#allocation2 + $0x8] sm:$0xff]
        %v243 = vld [vmem:[#allocation2 + $0x10] sm:$0xff]
        %v244 = vld [vmem:[#allocation2 + $0x18] sm:$0xff]
        %v245 = vld [vmem:[#allocation2 + $0x20] sm:$0xff]
        %v246 = vld [vmem:[#allocation2 + $0x28] sm:$0xff]
        %v247 = vld [vmem:[#allocation2 + $0x30] sm:$0xff]
        %v248 = vld [vmem:[#allocation2 + $0x38] sm:$0xff]
        %v249 = vld [vmem:[#allocation2 + $0x40] sm:$0xff]
        %v250 = vld [vmem:[#allocation2 + $0x48] sm:$0xff]
        %v251 = vld [vmem:[#allocation2 + $0x50] sm:$0xff]
        %v252 = vld [vmem:[#allocation2 + $0x58] sm:$0xff]
        %v253 = vld [vmem:[#allocation2 + $0x60] sm:$0xff]
        %v254 = vld [vmem:[#allocation2 + $0x68] sm:$0xff]
        %v255 = vld [vmem:[#allocation2 + $0x70] sm:$0xff]
        %v256 = vld [vmem:[#allocation2 + $0x78] sm:$0xff]
        %v257 = vld [vmem:[#allocation2 + $0x80] sm:$0xff]
        %v258 = vld [vmem:[#allocation2 + $0x88] sm:$0xff]
        %v259 = vld [vmem:[#allocation2 + $0x90] sm:$0xff]
        %v260 = vld [vmem:[#allocation2 + $0x98] sm:$0xff]
        %v261 = vld [vmem:[#allocation2 + $0xa0] sm:$0xff]
        %v262 = vld [vmem:[#allocation2 + $0xa8] sm:$0xff]
        %v263 = vld [vmem:[#allocation2 + $0xb0] sm:$0xff]
        %v264 = vld [vmem:[#allocation2 + $0xb8] sm:$0xff]
        %v265 = vld [vmem:[#allocation2 + $0xc0] sm:$0xff]
        %v266 = vld [vmem:[#allocation2 + $0xc8] sm:$0xff]
        %v267 = vld [vmem:[#allocation2 + $0xd0] sm:$0xff]
        %v268 = vld [vmem:[#allocation2 + $0xd8] sm:$0xff]
        %v269 = vld [vmem:[#allocation2 + $0xe0] sm:$0xff]
        %v270 = vld [vmem:[#allocation2 + $0xe8] sm:$0xff]
        %v271 = vld [vmem:[#allocation2 + $0xf0] sm:$0xff]
        %v272 = vld [vmem:[#allocation2 + $0xf8] sm:$0xff]
        %v273 = vld [vmem:[%s210] sm:$0xff]
        %v274 = vld [vmem:[%s210 + $0x8] sm:$0xff]
        %v275 = vld [vmem:[%s210 + $0x10] sm:$0xff]
        %v276 = vld [vmem:[%s210 + $0x18] sm:$0xff]
        %v277 = vld [vmem:[%s210 + $0x20] sm:$0xff]
        %v278 = vld [vmem:[%s210 + $0x28] sm:$0xff]
        %v279 = vld [vmem:[%s210 + $0x30] sm:$0xff]
        %v280 = vld [vmem:[%s210 + $0x38] sm:$0xff]
        %v281 = vld [vmem:[%s210 + $0x40] sm:$0xff]
        %v282 = vld [vmem:[%s210 + $0x48] sm:$0xff]
        %v283 = vld [vmem:[%s210 + $0x50] sm:$0xff]
        %v284 = vld [vmem:[%s210 + $0x58] sm:$0xff]
        %v285 = vld [vmem:[%s210 + $0x60] sm:$0xff]
        %v286 = vld [vmem:[%s210 + $0x68] sm:$0xff]
        %v287 = vld [vmem:[%s210 + $0x70] sm:$0xff]
        %v288 = vld [vmem:[%s210 + $0x78] sm:$0xff]
        %v289 = vld [vmem:[%s239] sm:$0x1]
        %v291 = vlaneseq
        %v292 = vshrl.u32 %v291, 7
        %v293 = vsub.s32 0, %v292
        %v294 = vrot.slane %v289, %v293
        %296 = vmatprep.subr.mxu0 0.0
        %297 = vmatpush1.msra.mxu0 %v273
        %298 = vmatprep.subr.mxu0 0.0
        %299 = vmatpush1.msra.mxu0 %v274
        %300 = vmatprep.subr.mxu0 0.0
        %301 = vmatpush1.msra.mxu0 %v275
        %302 = vmatprep.subr.mxu0 0.0
        %303 = vmatpush1.msra.mxu0 %v276
        %304 = vmatprep.subr.mxu0 0.0
        %305 = vmatpush1.msra.mxu0 %v277
        %306 = vmatprep.subr.mxu0 0.0
        %307 = vmatpush1.msra.mxu0 %v278
        %308 = vmatprep.subr.mxu0 0.0
        %309 = vmatpush1.msra.mxu0 %v279
        %310 = vmatprep.subr.mxu0 0.0
        %311 = vmatpush1.msra.mxu0 %v280
        %312 = vmatprep.subr.mxu0 0.0
        %313 = vmatpush1.msra.mxu0 %v281
        %314 = vmatprep.subr.mxu0 0.0
        %315 = vmatpush1.msra.mxu0 %v282
        %316 = vmatprep.subr.mxu0 0.0
        %317 = vmatpush1.msra.mxu0 %v283
        %318 = vmatprep.subr.mxu0 0.0
        %319 = vmatpush1.msra.mxu0 %v284
        %320 = vmatprep.subr.mxu0 0.0
        %321 = vmatpush1.msra.mxu0 %v285
        %322 = vmatprep.subr.mxu0 0.0
        %323 = vmatpush1.msra.mxu0 %v286
        %324 = vmatprep.subr.mxu0 0.0
        %325 = vmatpush1.msra.mxu0 %v287
        %326 = vmatprep.subr.mxu0 0.0
        %327 = vmatpush1.msra.mxu0 %v288
        %328 = vmatprep.subr.mxu0 0.0
        %329 = vmatpush1.msra.mxu0 0.0
        %330 = vmatprep.subr.mxu0 0.0
        %331 = vmatpush1.msra.mxu0 0.0
        %332 = vmatprep.subr.mxu0 0.0
        %333 = vmatpush1.msra.mxu0 0.0
        %334 = vmatprep.subr.mxu0 0.0
        %335 = vmatpush1.msra.mxu0 0.0
        %336 = vmatprep.subr.mxu0 0.0
        %337 = vmatpush1.msra.mxu0 0.0
        %338 = vmatprep.subr.mxu0 0.0
        %339 = vmatpush1.msra.mxu0 0.0
        %340 = vmatprep.subr.mxu0 0.0
        %341 = vmatpush1.msra.mxu0 0.0
        %342 = vmatprep.subr.mxu0 0.0
        %343 = vmatpush1.msra.mxu0 0.0
        %344 = vmatprep.subr.mxu0 0.0
        %345 = vmatpush1.msra.mxu0 0.0
        %346 = vmatprep.subr.mxu0 0.0
        %347 = vmatpush1.msra.mxu0 0.0
        %348 = vmatprep.subr.mxu0 0.0
        %349 = vmatpush1.msra.mxu0 0.0
        %350 = vmatprep.subr.mxu0 0.0
        %351 = vmatpush1.msra.mxu0 0.0
        %352 = vmatprep.subr.mxu0 0.0
        %353 = vmatpush1.msra.mxu0 0.0
        %354 = vmatprep.subr.mxu0 0.0
        %355 = vmatpush1.msra.mxu0 0.0
        %356 = vmatprep.subr.mxu0 0.0
        %357 = vmatpush1.msra.mxu0 0.0
        %358 = vmatprep.subr.mxu0 0.0
        %359 = vmatpush1.msra.mxu0 0.0
        %360 = vmatprep.mubr.f32.mxu0 0.0
        %361 = vmatmul.mubr.f32.gmra.mrb[0].mxu0 %v241
        %v362 = vpop.f32.mrb[0].mxu0
        %v363 = vadd.f32 %v294, %v362
        %v364 = vpop.f32.mrb[0].mxu0
        %365 = vmatprep.mubr.f32.mxu0 0.0
        %366 = vmatmul.mubr.f32.gmra.mrb[0].mxu0 %v242
        %v367 = vpop.f32.mrb[0].mxu0
        %v368 = vadd.f32 %v294, %v367
        %v369 = vpop.f32.mrb[0].mxu0
        %370 = vmatprep.mubr.f32.mxu0 0.0
        %371 = vmatmul.mubr.f32.gmra.mrb[0].mxu0 %v243
        %v372 = vpop.f32.mrb[0].mxu0
        %v373 = vadd.f32 %v294, %v372
        %v374 = vpop.f32.mrb[0].mxu0
        %375 = vmatprep.mubr.f32.mxu0 0.0
        %376 = vmatmul.mubr.f32.gmra.mrb[0].mxu0 %v244
        %v377 = vpop.f32.mrb[0].mxu0
        %v378 = vadd.f32 %v294, %v377
        %v379 = vpop.f32.mrb[0].mxu0
        %380 = vmatprep.mubr.f32.mxu0 0.0
        %381 = vmatmul.mubr.f32.gmra.mrb[0].mxu0 %v245
        %v382 = vpop.f32.mrb[0].mxu0
        %v383 = vadd.f32 %v294, %v382
        %v384 = vpop.f32.mrb[0].mxu0
        %385 = vmatprep.mubr.f32.mxu0 0.0
        %386 = vmatmul.mubr.f32.gmra.mrb[0].mxu0 %v246
        %v387 = vpop.f32.mrb[0].mxu0
        %v388 = vadd.f32 %v294, %v387
        %v389 = vpop.f32.mrb[0].mxu0
        %390 = vmatprep.mubr.f32.mxu0 0.0
        %391 = vmatmul.mubr.f32.gmra.mrb[0].mxu0 %v247
        %v392 = vpop.f32.mrb[0].mxu0
        %v393 = vadd.f32 %v294, %v392
        %v394 = vpop.f32.mrb[0].mxu0
        %395 = vmatprep.mubr.f32.mxu0 0.0
        %396 = vmatmul.mubr.f32.gmra.mrb[0].mxu0 %v248
        %v397 = vpop.f32.mrb[0].mxu0
        %v398 = vadd.f32 %v294, %v397
        %v399 = vpop.f32.mrb[0].mxu0
        %400 = vmatprep.mubr.f32.mxu0 0.0
        %401 = vmatmul.mubr.f32.gmra.mrb[0].mxu0 %v249
        %v402 = vpop.f32.mrb[0].mxu0
        %v403 = vadd.f32 %v294, %v402
        %v404 = vpop.f32.mrb[0].mxu0
        %405 = vmatprep.mubr.f32.mxu0 0.0
        %406 = vmatmul.mubr.f32.gmra.mrb[0].mxu0 %v250
        %v407 = vpop.f32.mrb[0].mxu0
        %v408 = vadd.f32 %v294, %v407
        %v409 = vpop.f32.mrb[0].mxu0
        %410 = vmatprep.mubr.f32.mxu0 0.0
        %411 = vmatmul.mubr.f32.gmra.mrb[0].mxu0 %v251
        %v412 = vpop.f32.mrb[0].mxu0
        %v413 = vadd.f32 %v294, %v412
        %v414 = vpop.f32.mrb[0].mxu0
        %415 = vmatprep.mubr.f32.mxu0 0.0
        %416 = vmatmul.mubr.f32.gmra.mrb[0].mxu0 %v252
        %v417 = vpop.f32.mrb[0].mxu0
        %v418 = vadd.f32 %v294, %v417
        %v419 = vpop.f32.mrb[0].mxu0
        %420 = vmatprep.mubr.f32.mxu0 0.0
        %421 = vmatmul.mubr.f32.gmra.mrb[0].mxu0 %v253
        %v422 = vpop.f32.mrb[0].mxu0
        %v423 = vadd.f32 %v294, %v422
        %v424 = vpop.f32.mrb[0].mxu0
        %425 = vmatprep.mubr.f32.mxu0 0.0
        %426 = vmatmul.mubr.f32.gmra.mrb[0].mxu0 %v254
        %v427 = vpop.f32.mrb[0].mxu0
        %v428 = vadd.f32 %v294, %v427
        %v429 = vpop.f32.mrb[0].mxu0
        %430 = vmatprep.mubr.f32.mxu0 0.0
        %431 = vmatmul.mubr.f32.gmra.mrb[0].mxu0 %v255
        %v432 = vpop.f32.mrb[0].mxu0
        %v433 = vadd.f32 %v294, %v432
        %v434 = vpop.f32.mrb[0].mxu0
        %435 = vmatprep.mubr.f32.mxu0 0.0
        %436 = vmatmul.mubr.f32.gmra.mrb[0].mxu0 %v256
        %v437 = vpop.f32.mrb[0].mxu0
        %v438 = vadd.f32 %v294, %v437
        %v439 = vpop.f32.mrb[0].mxu0
        %440 = vmatprep.mubr.f32.mxu0 0.0
        %441 = vmatmul.mubr.f32.gmra.mrb[0].mxu0 %v257
        %v442 = vpop.f32.mrb[0].mxu0
        %v443 = vadd.f32 %v294, %v442
        %v444 = vpop.f32.mrb[0].mxu0
        %445 = vmatprep.mubr.f32.mxu0 0.0
        %446 = vmatmul.mubr.f32.gmra.mrb[0].mxu0 %v258
        %v447 = vpop.f32.mrb[0].mxu0
        %v448 = vadd.f32 %v294, %v447
        %v449 = vpop.f32.mrb[0].mxu0
        %450 = vmatprep.mubr.f32.mxu0 0.0
        %451 = vmatmul.mubr.f32.gmra.mrb[0].mxu0 %v259
        %v452 = vpop.f32.mrb[0].mxu0
        %v453 = vadd.f32 %v294, %v452
        %v454 = vpop.f32.mrb[0].mxu0
        %455 = vmatprep.mubr.f32.mxu0 0.0
        %456 = vmatmul.mubr.f32.gmra.mrb[0].mxu0 %v260
        %v457 = vpop.f32.mrb[0].mxu0
        %v458 = vadd.f32 %v294, %v457
        %v459 = vpop.f32.mrb[0].mxu0
        %460 = vmatprep.mubr.f32.mxu0 0.0
        %461 = vmatmul.mubr.f32.gmra.mrb[0].mxu0 %v261
        %v462 = vpop.f32.mrb[0].mxu0
        %v463 = vadd.f32 %v294, %v462
        %v464 = vpop.f32.mrb[0].mxu0
        %465 = vmatprep.mubr.f32.mxu0 0.0
        %466 = vmatmul.mubr.f32.gmra.mrb[0].mxu0 %v262
        %v467 = vpop.f32.mrb[0].mxu0
        %v468 = vadd.f32 %v294, %v467
        %v469 = vpop.f32.mrb[0].mxu0
        %470 = vmatprep.mubr.f32.mxu0 0.0
        %471 = vmatmul.mubr.f32.gmra.mrb[0].mxu0 %v263
        %v472 = vpop.f32.mrb[0].mxu0
        %v473 = vadd.f32 %v294, %v472
        %v474 = vpop.f32.mrb[0].mxu0
        %475 = vmatprep.mubr.f32.mxu0 0.0
        %476 = vmatmul.mubr.f32.gmra.mrb[0].mxu0 %v264
        %v477 = vpop.f32.mrb[0].mxu0
        %v478 = vadd.f32 %v294, %v477
        %v479 = vpop.f32.mrb[0].mxu0
        %480 = vmatprep.mubr.f32.mxu0 0.0
        %481 = vmatmul.mubr.f32.gmra.mrb[0].mxu0 %v265
        %v482 = vpop.f32.mrb[0].mxu0
        %v483 = vadd.f32 %v294, %v482
        %v484 = vpop.f32.mrb[0].mxu0
        %485 = vmatprep.mubr.f32.mxu0 0.0
        %486 = vmatmul.mubr.f32.gmra.mrb[0].mxu0 %v266
        %v487 = vpop.f32.mrb[0].mxu0
        %v488 = vadd.f32 %v294, %v487
        %v489 = vpop.f32.mrb[0].mxu0
        %490 = vmatprep.mubr.f32.mxu0 0.0
        %491 = vmatmul.mubr.f32.gmra.mrb[0].mxu0 %v267
        %v492 = vpop.f32.mrb[0].mxu0
        %v493 = vadd.f32 %v294, %v492
        %v494 = vpop.f32.mrb[0].mxu0
        %495 = vmatprep.mubr.f32.mxu0 0.0
        %496 = vmatmul.mubr.f32.gmra.mrb[0].mxu0 %v268
        %v497 = vpop.f32.mrb[0].mxu0
        %v498 = vadd.f32 %v294, %v497
        %v499 = vpop.f32.mrb[0].mxu0
        %500 = vmatprep.mubr.f32.mxu0 0.0
        %501 = vmatmul.mubr.f32.gmra.mrb[0].mxu0 %v269
        %v502 = vpop.f32.mrb[0].mxu0
        %v503 = vadd.f32 %v294, %v502
        %v504 = vpop.f32.mrb[0].mxu0
        %505 = vmatprep.mubr.f32.mxu0 0.0
        %506 = vmatmul.mubr.f32.gmra.mrb[0].mxu0 %v270
        %v507 = vpop.f32.mrb[0].mxu0
        %v508 = vadd.f32 %v294, %v507
        %v509 = vpop.f32.mrb[0].mxu0
        %510 = vmatprep.mubr.f32.mxu0 0.0
        %511 = vmatmul.mubr.f32.gmra.mrb[0].mxu0 %v271
        %v512 = vpop.f32.mrb[0].mxu0
        %v513 = vadd.f32 %v294, %v512
        %v514 = vpop.f32.mrb[0].mxu0
        %515 = vmatprep.mubr.f32.mxu0 0.0
        %516 = vmatmul.mubr.f32.gmra.mrb[0].mxu0 %v272
        %v517 = vpop.f32.mrb[0].mxu0
        %v518 = vadd.f32 %v294, %v517
        %v519 = vpop.f32.mrb[0].mxu0
        %520 = vdwg.mxu0
        %521 = vst [vmem:[%s235] sm:$0xff] %v363
        %522 = vst [vmem:[%s235 + $0x8] sm:$0xff] %v368
        %523 = vst [vmem:[%s235 + $0x10] sm:$0xff] %v373
        %524 = vst [vmem:[%s235 + $0x18] sm:$0xff] %v378
        %525 = vst [vmem:[%s235 + $0x20] sm:$0xff] %v383
        %526 = vst [vmem:[%s235 + $0x28] sm:$0xff] %v388
        %527 = vst [vmem:[%s235 + $0x30] sm:$0xff] %v393
        %528 = vst [vmem:[%s235 + $0x38] sm:$0xff] %v398
        %529 = vst [vmem:[%s235 + $0x40] sm:$0xff] %v403
        %530 = vst [vmem:[%s235 + $0x48] sm:$0xff] %v408
        %531 = vst [vmem:[%s235 + $0x50] sm:$0xff] %v413
        %532 = vst [vmem:[%s235 + $0x58] sm:$0xff] %v418
        %533 = vst [vmem:[%s235 + $0x60] sm:$0xff] %v423
        %534 = vst [vmem:[%s235 + $0x68] sm:$0xff] %v428
        %535 = vst [vmem:[%s235 + $0x70] sm:$0xff] %v433
        %536 = vst [vmem:[%s235 + $0x78] sm:$0xff] %v438
        %537 = vst [vmem:[%s235 + $0x80] sm:$0xff] %v443
        %538 = vst [vmem:[%s235 + $0x88] sm:$0xff] %v448
        %539 = vst [vmem:[%s235 + $0x90] sm:$0xff] %v453
        %540 = vst [vmem:[%s235 + $0x98] sm:$0xff] %v458
        %541 = vst [vmem:[%s235 + $0xa0] sm:$0xff] %v463
        %542 = vst [vmem:[%s235 + $0xa8] sm:$0xff] %v468
        %543 = vst [vmem:[%s235 + $0xb0] sm:$0xff] %v473
        %544 = vst [vmem:[%s235 + $0xb8] sm:$0xff] %v478
        %545 = vst [vmem:[%s235 + $0xc0] sm:$0xff] %v483
        %546 = vst [vmem:[%s235 + $0xc8] sm:$0xff] %v488
        %547 = vst [vmem:[%s235 + $0xd0] sm:$0xff] %v493
        %548 = vst [vmem:[%s235 + $0xd8] sm:$0xff] %v498
        %549 = vst [vmem:[%s235 + $0xe0] sm:$0xff] %v503
        %550 = vst [vmem:[%s235 + $0xe8] sm:$0xff] %v508
        %551 = vst [vmem:[%s235 + $0xf0] sm:$0xff] %v513
        %552 = vst [vmem:[%s235 + $0xf8] sm:$0xff] %v518
        %s553 = sand.u32 %s121, 1
        %s554 = scalar_lea.sflag [#allocation4], %s553
        %s555 = sand.u32 %s121, 1
        %s556 = smul.addr %s555, 256
        %s557 = scalar_lea.vmem [#allocation7], %s556
        // Predicated region
        $region41: #{tpu_custom_call.1} parent=31 // pred_check
          %p558 = pneg %p131
        $region42: #{tpu_custom_call.1} parent=31 // pred_check_branch
          %560 = sbr.rel (%p558) target = $region44
        $region43: #{tpu_custom_call.1} parent=31 // pred_region
          %s561 = smul.u32 32, %s25
          %s563 = ssub.s32 4096, 4096
          %564 = vsyncadd %s554, %s563
          %s565 = smul.addr %s561, 3
          %s566 = sadd.s32 %s26, %s565
          %s567 = smul.addr %s566, 128
          %s568 = scalar_lea.hbm %s3, %s567
          %s569 = sshll.u32 %s557, 4
          %s570 = int_to_ptr.vmem [resolvable:$true] %s569
          %575 = dma.vmem_to_hbm [thread:$0]  %s570, 4096, %s568, %s554, 128, 384, 8
        $region44: #{tpu_custom_call.1} parent=31 // pred_fallthru
          _
      $region32: #{tpu_custom_call.1} parent=5 // pred_fallthru
        _
      %p576 = scmp.le.s32.totalorder 2, %s16
      // Predicated region
      $region45: #{tpu_custom_call.1} parent=5 // pred_check
        %p577 = pneg %p576
      $region46: #{tpu_custom_call.1} parent=5 // pred_check_branch
        %579 = sbr.rel (%p577) target = $region48
      $region47: #{tpu_custom_call.1} parent=5 // pred_region
        %s580 = ssub.s32 %s16, 2
        // Predicated region
        $region49: #{tpu_custom_call.1} parent=47 // pred_check
          %p581 = pneg %p137
        $region50: #{tpu_custom_call.1} parent=47 // pred_check_branch
          %583 = sbr.rel (%p581) target = $region52
        $region51: #{tpu_custom_call.1} parent=47 // pred_region
          %s584 = sand.u32 %s122, 1
          %s585 = scalar_lea.sflag [#allocation4], %s584
          %s586 = sand.u32 %s122, 1
          %s587 = smul.addr %s586, 256
          %s588 = scalar_lea.vmem [#allocation7], %s587
          %589 = dma.done %s585, 4096
        $region52: #{tpu_custom_call.1} parent=47 // pred_fallthru
          _
      $region48: #{tpu_custom_call.1} parent=5 // pred_fallthru
        _
    $region6: #{tpu_custom_call.1} parent=1 // loop_footer
      %s20 = sadd.s32 1, %s16
    $region7: #{tpu_custom_call.1} parent=1 // loop_footer_branch
      %15 = sbr.rel target = $region3
    $region8: #{tpu_custom_call.1} parent=1 // loop_exit
      _
    %590 = vsyncpa [#allocation3], 1
    %s591 = scalar_lea.sflag [#allocation3], 1
    %592 = vsyncpa %s591, 1
    %593 = vsyncpa [#allocation6], 1
    %s594 = scalar_lea.sflag [#allocation6], 1
    %595 = vsyncpa %s594, 1
    %596 = vsyncpa [#allocation4], 1
    %s597 = scalar_lea.sflag [#allocation4], 1
    %598 = vsyncpa %s597, 1

</llo_original>
